<compile_context>
chip_gen: v6e
topology: v6e:2x2x1
jax: 0.10.0
libtpu: 0.0.40
codegen_flags: <defaults>
</compile_context>

<pallas_src>
import math

import jax
import jax.numpy as jnp
from jax.experimental import pallas as pl
from jax.experimental.pallas import tpu as pltpu


def _round_up(a: int, b: int) -> int:
    return pl.cdiv(a, b) * b


def _round_down(a: int, b: int) -> int:
    return (a // b) * b


def _vmem_budget_bytes() -> int:
    """Per-generation scoped-VMEM budget for the double-buffered working set."""
    try:
        cap = int(pltpu.get_tpu_info().vmem_capacity_bytes)
    except Exception:
        cap = 128 << 20
    # v7x: 64 MiB per TensorCore -> leave headroom; 128 MiB chips can go bigger.
    return (40 << 20) if cap <= (64 << 20) else (48 << 20)


# ----------------------------- kernels --------------------------------------


def _sht_kernel_single(x_ref, y_ref, o_ref):
    # Single K step: no scratch accumulator round-trip, write the MXU result.
    o_ref[...] = jnp.dot(
        x_ref[...], y_ref[...], preferred_element_type=jnp.float32
    ).astype(o_ref.dtype)


def _sht_kernel_acc(x_ref, y_ref, o_ref, acc_ref):
    # x_ref   : (tm, tk)      row/K tile of the (pre-weighted) signal
    # y_ref   : (tk, tn)      K/N tile of the area-weighted, padded basis
    # o_ref   : (tm, tn)      lane-dense output tile
    # acc_ref : (tm, tn) f32  accumulator, resident across the K grid axis
    k = pl.program_id(2)
    part = jnp.dot(x_ref[...], y_ref[...], preferred_element_type=jnp.float32)

    @pl.when(k == 0)
    def _():
        acc_ref[...] = part          # assign: skip the zero-fill + load/add pass

    @pl.when(k > 0)
    def _():
        acc_ref[...] += part

    @pl.when(k == pl.num_programs(2) - 1)
    def _():
        o_ref[...] = acc_ref[...].astype(o_ref.dtype)


# ----------------------------- module-style wrapper --------------------------


class SHT:
    """Pallas-TPU SHT: out[b, c, :] = (area * x[b, c, :]) @ Y_inv[:, :(L+1)**2].

    The area-weighted, zero-padded basis and all tile sizes that depend only
    on (L, n_vertex, dtype) are prepared once here; __call__ only pads/reshapes
    the signal and launches the matmul kernel.
    """

    def __init__(self, L, Y_inv, area, *, compute_dtype=None,
                 tm_cap=256, target_tile_bytes=4 << 20):
        self.L = int(L)
        self.n_coef = (self.L + 1) ** 2
        self.compute_dtype = (jnp.dtype(compute_dtype)
                              if compute_dtype is not None else None)
        self.tm_cap = int(tm_cap)
        self.budget = _vmem_budget_bytes()

        Y_inv = jnp.asarray(Y_inv)
        area = jnp.asarray(area)
        V = Y_inv.shape[0]
        self.n_vertex = V
        n_coef = self.n_coef

        # Lane-dense padded output width; 256-aligned above 128 (v6e/v7x MXU).
        Np = 128 if n_coef <= 128 else _round_up(n_coef, 256)
        # N tile that divides Np (Np is a multiple of 256 whenever it is > 128).
        if Np <= 512:
            tn = Np
        elif Np % 512 == 0:
            tn = 512
        else:
            tn = 256
        self.Np, self.tn = Np, tn

        base_dt = (self.compute_dtype if self.compute_dtype is not None
                   else jnp.dtype(Y_inv.dtype))
        itemsize = jnp.dtype(base_dt).itemsize
        self._in_itemsize = itemsize

        # K tile aiming at ~target_tile_bytes of basis per grid step, clamped so
        # the double-buffered working set fits the per-generation VMEM budget.
        tk_target = max(512, _round_down(
            target_tile_bytes // max(1, tn * itemsize), 256))
        while tk_target > 512:
            need = (2 * (self.tm_cap * tk_target + tk_target * tn) * itemsize
                    + 3 * self.tm_cap * tn * 4)
            if need <= self.budget:
                break
            tk_target -= 256
        Vp128 = _round_up(V, 128)
        if tk_target >= Vp128:
            tk, Vp, nk = Vp128, Vp128, 1
        else:
            # Pick the K-step count first so V padding waste stays small.
            nk = pl.cdiv(Vp128, tk_target)
            tk = _round_up(pl.cdiv(V, nk), 256)
            Vp = nk * tk
        self.tk, self.Vp, self.nk = tk, Vp, nk

        # ---- one-time basis preprocessing (hoisted out of the call path) ----
        # Fold area in f32 before any narrow cast; zero padding is exact.
        y_w = (Y_inv[:, :n_coef].astype(jnp.float32)
               * area.astype(jnp.float32)[:, None])
        if self.compute_dtype is not None:
            y_w = y_w.astype(self.compute_dtype)
        self.y_p = jnp.pad(y_w, ((0, Vp - V), (0, Np - n_coef)))   # [Vp, Np]

    def __call__(self, x):
        B, C, V = x.shape
        assert V == self.n_vertex, "vertex count mismatch with prepared basis"
        M = B * C
        out_dtype = x.dtype
        cdtype = (self.compute_dtype if self.compute_dtype is not None
                  else jnp.dtype(x.dtype))
        itemsize = jnp.dtype(cdtype).itemsize

        tk, Vp, tn, Np, nk = self.tk, self.Vp, self.tn, self.Np, self.nk
        nj = Np // tn

        # Row tile: aligned to the packed sublane tile (8 rows f32, 16 bf16,
        # 32 int8/fp8); grow up to tm_cap so the basis is re-streamed as few
        # times as possible; shrink only if the working set exceeds the budget.
        sub = max(8, 32 // max(1, itemsize))
        tm = min(self.tm_cap, _round_up(M, sub))

        def _need(tm_):
            return (2 * (tm_ * tk + tk * tn) * itemsize
                    + 2 * tm_ * tn * jnp.dtype(out_dtype).itemsize
                    + (tm_ * tn * 4 if nk > 1 else 0))

        while tm > sub and _need(tm) > self.budget:
            tm = max(sub, _round_up(tm // 2, sub))
        Mp = _round_up(M, tm)

        x2d = x.reshape(M, V).astype(cdtype)
        if Mp != M or Vp != V:
            x2d = jnp.pad(x2d, ((0, Mp - M), (0, Vp - V)))         # [Mp, Vp]

        vmem_limit = int(min(self.budget, max(_need(tm) + (4 << 20), 16 << 20)))
        cost = pl.CostEstimate(
            flops=2 * M * V * self.n_coef,
            transcendentals=0,
            bytes_accessed=((M * V + V * self.n_coef) * itemsize
                            + M * self.n_coef * jnp.dtype(out_dtype).itemsize),
        )
        cparams = pltpu.CompilerParams(
            dimension_semantics=(("parallel", "parallel", "arbitrary")
                                 if nk > 1 else ("parallel", "parallel")),
            vmem_limit_bytes=vmem_limit,
            # Let the reshape/cast/pad producing x (and the basis constant)
            # fuse into the pallas_call inputs instead of materializing in HBM.
            allow_input_fusion=[True, True],
        )

        if nk > 1:
            grid_spec = pltpu.PrefetchScalarGridSpec(
                num_scalar_prefetch=0,
                grid=(Mp // tm, nj, nk),
                in_specs=[
                    pl.BlockSpec((tm, tk), lambda i, j, k: (i, k)),  # signal
                    pl.BlockSpec((tk, tn), lambda i, j, k: (k, j)),  # basis
                ],
                out_specs=pl.BlockSpec((tm, tn), lambda i, j, k: (i, j)),
                scratch_shapes=[pltpu.VMEM((tm, tn), jnp.float32)],
            )
            kernel = _sht_kernel_acc
        else:
            grid_spec = pltpu.PrefetchScalarGridSpec(
                num_scalar_prefetch=0,
                grid=(Mp // tm, nj),
                in_specs=[
                    pl.BlockSpec((tm, Vp), lambda i, j: (i, 0)),
                    pl.BlockSpec((Vp, tn), lambda i, j: (0, j)),
                ],
                out_specs=pl.BlockSpec((tm, tn), lambda i, j: (i, j)),
            )
            kernel = _sht_kernel_single

        out2d = pl.pallas_call(
            kernel,
            out_shape=jax.ShapeDtypeStruct((Mp, Np), out_dtype),
            grid_spec=grid_spec,
            compiler_params=cparams,
            cost_estimate=cost,
        )(x2d, self.y_p)

        return out2d[:M, :self.n_coef].reshape(B, C, self.n_coef)


def sht_reference(x, y_inv, area, L):
    n_coef = (L + 1) ** 2
    return jnp.matmul(x * area, y_inv[:, :n_coef])


if __name__ == "__main__":
    key = jax.random.PRNGKey(0)
    k1, k2, k3 = jax.random.split(key, 3)

    # Small, module-consistent shapes.
    batch, n_ch = 2, 4
    n_vertex = 256
    L = 3
    basis_cols = (L + 2) ** 2   # wider than needed; the module slices to (L+1)**2

    x = jax.random.normal(k1, (batch, n_ch, n_vertex), dtype=jnp.float32)
    y_inv = jax.random.normal(k2, (n_vertex, basis_cols), dtype=jnp.float32) / math.sqrt(n_vertex)
    area = jax.random.uniform(k3, (n_vertex,), dtype=jnp.float32) * (4.0 * math.pi / n_vertex)

    ref = sht_reference(x, y_inv, area, L)

    # f32 path (default): strict tolerance.
    sht_f32 = SHT(L, y_inv, area)
    out = jax.block_until_ready(sht_f32(x))
    assert out.shape == (batch, n_ch, (L + 1) ** 2)
    assert jnp.allclose(out, ref, atol=1e-4, rtol=1e-4), "f32 mismatch vs reference"

    # bf16-operand path (f32 MXU accumulation): relaxed tolerance.
    # (f32 escape hatch kept as the default for high-L / high-dynamic-range bases.)
    sht_bf16 = SHT(L, y_inv, area, compute_dtype=jnp.bfloat16)
    out_bf16 = jax.block_until_ready(sht_bf16(x))
    assert out_bf16.shape == (batch, n_ch, (L + 1) ** 2)
    assert jnp.allclose(out_bf16, ref, atol=3e-2, rtol=3e-2), "bf16 mismatch vs reference"

    print("KERNEL_OK")
</pallas_src>

<mosaic_0001>
module attributes {stable_mosaic.version = 11 : i64} {
  func.func @_sht_kernel_single(%arg0: i32, %arg1: i32, %arg2: memref<8x256xf32, #tpu.memory_space<vmem>>, %arg3: memref<256x128xf32, #tpu.memory_space<vmem>>, %arg4: memref<8x128xf32, #tpu.memory_space<vmem>>) attributes {dimension_semantics = [#tpu.dimension_semantics<parallel>, #tpu.dimension_semantics<parallel>], iteration_bounds = array<i64: 1, 1>, scalar_prefetch = 0 : i64, scratch_operands = 0 : i64, tpu.core_type = #tpu.core_type<tc>, window_params = [{transform_indices = @transform_0, window_bounds = array<i64: 8, 256>}, {transform_indices = @transform_1, window_bounds = array<i64: 256, 128>}, {transform_indices = @transform_2, window_bounds = array<i64: 8, 128>}]} {
    %c0 = arith.constant 0 : index
    %c0_0 = arith.constant 0 : index
    %0 = vector.load %arg2[%c0, %c0_0] : memref<8x256xf32, #tpu.memory_space<vmem>>, vector<8x256xf32>
    %c0_1 = arith.constant 0 : index
    %c0_2 = arith.constant 0 : index
    %1 = vector.load %arg3[%c0_1, %c0_2] : memref<256x128xf32, #tpu.memory_space<vmem>>, vector<256x128xf32>
    %cst = arith.constant dense<0.000000e+00> : vector<8x128xf32>
    %2 = tpu.matmul %0, %1, %cst {dimension_numbers = #tpu.dot_dimension_numbers<[1], [0], [0], [1], [0, 0, 1, 1], [], []>} : vector<8x256xf32>, vector<256x128xf32>, vector<8x128xf32> -> vector<8x128xf32>
    %c0_3 = arith.constant 0 : index
    %c0_4 = arith.constant 0 : index
    %3 = vector.load %arg4[%c0_3, %c0_4] : memref<8x128xf32, #tpu.memory_space<vmem>>, vector<8x128xf32>
    tpu.vector_store %arg4[%c0_3, %c0_4], %2 {strides = array<i32>} : memref<8x128xf32, #tpu.memory_space<vmem>>, vector<8x128xf32>,
    return
  }
  func.func @transform_0(%arg0: i32, %arg1: i32) -> (i32, i32) {
    %c0_i32 = arith.constant 0 : i32
    %c0_i32_0 = arith.constant 0 : i32
    return %arg0, %c0_i32 : i32, i32
  }
  func.func @transform_1(%arg0: i32, %arg1: i32) -> (i32, i32) {
    %c0_i32 = arith.constant 0 : i32
    %c0_i32_0 = arith.constant 0 : i32
    return %c0_i32, %arg1 : i32, i32
  }
  func.func @transform_2(%arg0: i32, %arg1: i32) -> (i32, i32) {
    %c0_i32 = arith.constant 0 : i32
    return %arg0, %arg1 : i32, i32
  }
}

</mosaic_0001>

<llo_original>
// kernel: tpu_custom_call.1
$region0: #{tpu_custom_call.1}
  #allocation0 [shape = 'u32[]', space=smem, size = 0x4, offset = 0x4, fixed_abs, tag = 'smem constant byte address 0x4 - core index']
  #allocation1 [shape = 'u32[144,128]{1,0:T(1,128)}', space=vmem, size = 0x12000, scoped, tag = 'internal scratch']
  %s0 = inlined_call_operand.hbm [shape: f32[8,256], index: 0, kind: input, shape index: {}]
  %s1 = inlined_call_operand.hbm [shape: f32[256,128], index: 1, kind: input, shape index: {}]
  %s2 = inlined_call_operand.hbm [shape: f32[8,128], index: 2, kind: output, shape index: {}]
  %s3 = sld [smem:[#allocation0]]
  $region26: #{tpu_custom_call.1} parent=0
    _
  %s5 = ssub.s32 1, %s3
  %s6 = scalar_select 0, %s5, %s3
  $region1: #{tpu_custom_call.1} parent=0
    #allocation2 [shape = 'u8[8192]{0}', space=vmem, size = 0x2000, scoped, tag = 'input window, operand 0, single buffered']
    #allocation3 [shape = 's32[1]{0}', space=sflag, size = 0x4, scoped, tag = 'scoped memory for tpu_custom_call.1']
    #allocation4 [shape = 's32[1]{0}', space=sflag, size = 0x4, scoped, tag = 'scoped memory for tpu_custom_call.1']
    #allocation5 [shape = 'u8[131072]{0}', space=vmem, size = 0x20000, scoped, tag = 'input window, operand 1, single buffered']
    #allocation6 [shape = 's32[1]{0}', space=sflag, size = 0x4, scoped, tag = 'scoped memory for tpu_custom_call.1']
    #allocation7 [shape = 'u8[4096]{0}', space=vmem, size = 0x1000, scoped, tag = 'output window, operand 0, single buffered']
    %7 = vsyncpa [#allocation3], 0
    %8 = vsyncpa [#allocation6], 0
    %9 = vsyncpa [#allocation4], 0
    // Predicated region
    $region2: #{tpu_custom_call.1} parent=1 // pred_check
      _
    $region3: #{tpu_custom_call.1} parent=1 // pred_check_branch
      %11 = sbr.rel (0) target = $region5
    $region4: #{tpu_custom_call.1} parent=1 // pred_region
      %s13 = ssub.s32 256, 256
      %14 = vsyncadd [#allocation3], %s13
      %s16 = sshll.u32 [#allocation2], 4
      %s17 = int_to_ptr.vmem [resolvable:$true] %s16
      %19 = dma.hbm_to_vmem [thread:$0]  %s0, 256, %s17, [#allocation3]
    $region5: #{tpu_custom_call.1} parent=1 // pred_fallthru
      _
    // Predicated region
    $region6: #{tpu_custom_call.1} parent=1 // pred_check
      _
    $region7: #{tpu_custom_call.1} parent=1 // pred_check_branch
      %21 = sbr.rel (0) target = $region9
    $region8: #{tpu_custom_call.1} parent=1 // pred_region
      %s23 = ssub.s32 4096, 4096
      %24 = vsyncadd [#allocation6], %s23
      %s25 = sshll.u32 [#allocation5], 4
      %s26 = int_to_ptr.vmem [resolvable:$true] %s25
      %31 = dma.hbm_to_vmem [thread:$0]  %s1, 4096, %s26, [#allocation6], 128, 128, 8
    $region9: #{tpu_custom_call.1} parent=1 // pred_fallthru
      _
    // Predicated region
    $region10: #{tpu_custom_call.1} parent=1 // pred_check
      _
    $region11: #{tpu_custom_call.1} parent=1 // pred_check_branch
      %33 = sbr.rel (0) target = $region13
    $region12: #{tpu_custom_call.1} parent=1 // pred_region
      %34 = dma.done [#allocation3], 256
    $region13: #{tpu_custom_call.1} parent=1 // pred_fallthru
      _
    // Predicated region
    $region14: #{tpu_custom_call.1} parent=1 // pred_check
      _
    $region15: #{tpu_custom_call.1} parent=1 // pred_check_branch
      %36 = sbr.rel (0) target = $region17
    $region16: #{tpu_custom_call.1} parent=1 // pred_region
      %37 = dma.done [#allocation6], 4096
    $region17: #{tpu_custom_call.1} parent=1 // pred_fallthru
      _
    %v38 = vld [vmem:[#allocation2] sm:$0xff]
    %v39 = vld [vmem:[#allocation2 + $0x8] sm:$0xff]
    %v40 = vld [vmem:[#allocation5] sm:$0xff]
    %v41 = vld [vmem:[#allocation5 + $0x8] sm:$0xff]
    %v42 = vld [vmem:[#allocation5 + $0x10] sm:$0xff]
    %v43 = vld [vmem:[#allocation5 + $0x18] sm:$0xff]
    %v44 = vld [vmem:[#allocation5 + $0x20] sm:$0xff]
    %v45 = vld [vmem:[#allocation5 + $0x28] sm:$0xff]
    %v46 = vld [vmem:[#allocation5 + $0x30] sm:$0xff]
    %v47 = vld [vmem:[#allocation5 + $0x38] sm:$0xff]
    %v48 = vld [vmem:[#allocation5 + $0x40] sm:$0xff]
    %v49 = vld [vmem:[#allocation5 + $0x48] sm:$0xff]
    %v50 = vld [vmem:[#allocation5 + $0x50] sm:$0xff]
    %v51 = vld [vmem:[#allocation5 + $0x58] sm:$0xff]
    %v52 = vld [vmem:[#allocation5 + $0x60] sm:$0xff]
    %v53 = vld [vmem:[#allocation5 + $0x68] sm:$0xff]
    %v54 = vld [vmem:[#allocation5 + $0x70] sm:$0xff]
    %v55 = vld [vmem:[#allocation5 + $0x78] sm:$0xff]
    %v56 = vld [vmem:[#allocation5 + $0x80] sm:$0xff]
    %v57 = vld [vmem:[#allocation5 + $0x88] sm:$0xff]
    %v58 = vld [vmem:[#allocation5 + $0x90] sm:$0xff]
    %v59 = vld [vmem:[#allocation5 + $0x98] sm:$0xff]
    %v60 = vld [vmem:[#allocation5 + $0xa0] sm:$0xff]
    %v61 = vld [vmem:[#allocation5 + $0xa8] sm:$0xff]
    %v62 = vld [vmem:[#allocation5 + $0xb0] sm:$0xff]
    %v63 = vld [vmem:[#allocation5 + $0xb8] sm:$0xff]
    %v64 = vld [vmem:[#allocation5 + $0xc0] sm:$0xff]
    %v65 = vld [vmem:[#allocation5 + $0xc8] sm:$0xff]
    %v66 = vld [vmem:[#allocation5 + $0xd0] sm:$0xff]
    %v67 = vld [vmem:[#allocation5 + $0xd8] sm:$0xff]
    %v68 = vld [vmem:[#allocation5 + $0xe0] sm:$0xff]
    %v69 = vld [vmem:[#allocation5 + $0xe8] sm:$0xff]
    %v70 = vld [vmem:[#allocation5 + $0xf0] sm:$0xff]
    %v71 = vld [vmem:[#allocation5 + $0xf8] sm:$0xff]
    %72 = vmatprep.subr.mxu0 0.0
    %73 = vmatpush1.msra.mxu0 %v55
    %74 = vmatprep.subr.mxu0 0.0
    %75 = vmatpush1.msra.mxu0 %v54
    %76 = vmatprep.subr.mxu0 0.0
    %77 = vmatpush1.msra.mxu0 %v53
    %78 = vmatprep.subr.mxu0 0.0
    %79 = vmatpush1.msra.mxu0 %v52
    %80 = vmatprep.subr.mxu0 0.0
    %81 = vmatpush1.msra.mxu0 %v51
    %82 = vmatprep.subr.mxu0 0.0
    %83 = vmatpush1.msra.mxu0 %v50
    %84 = vmatprep.subr.mxu0 0.0
    %85 = vmatpush1.msra.mxu0 %v49
    %86 = vmatprep.subr.mxu0 0.0
    %87 = vmatpush1.msra.mxu0 %v48
    %88 = vmatprep.subr.mxu0 0.0
    %89 = vmatpush1.msra.mxu0 %v47
    %90 = vmatprep.subr.mxu0 0.0
    %91 = vmatpush1.msra.mxu0 %v46
    %92 = vmatprep.subr.mxu0 0.0
    %93 = vmatpush1.msra.mxu0 %v45
    %94 = vmatprep.subr.mxu0 0.0
    %95 = vmatpush1.msra.mxu0 %v44
    %96 = vmatprep.subr.mxu0 0.0
    %97 = vmatpush1.msra.mxu0 %v43
    %98 = vmatprep.subr.mxu0 0.0
    %99 = vmatpush1.msra.mxu0 %v42
    %100 = vmatprep.subr.mxu0 0.0
    %101 = vmatpush1.msra.mxu0 %v41
    %102 = vmatprep.subr.mxu0 0.0
    %103 = vmatpush1.msra.mxu0 %v40
    %104 = vmatprep.subr.mxu0 0.0
    %105 = vmatpush2.msra.mxu0 %v71
    %106 = vmatprep.subr.mxu0 0.0
    %107 = vmatpush2.msra.mxu0 %v70
    %108 = vmatprep.subr.mxu0 0.0
    %109 = vmatpush2.msra.mxu0 %v69
    %110 = vmatprep.subr.mxu0 0.0
    %111 = vmatpush2.msra.mxu0 %v68
    %112 = vmatprep.subr.mxu0 0.0
    %113 = vmatpush2.msra.mxu0 %v67
    %114 = vmatprep.subr.mxu0 0.0
    %115 = vmatpush2.msra.mxu0 %v66
    %116 = vmatprep.subr.mxu0 0.0
    %117 = vmatpush2.msra.mxu0 %v65
    %118 = vmatprep.subr.mxu0 0.0
    %119 = vmatpush2.msra.mxu0 %v64
    %120 = vmatprep.subr.mxu0 0.0
    %121 = vmatpush2.msra.mxu0 %v63
    %122 = vmatprep.subr.mxu0 0.0
    %123 = vmatpush2.msra.mxu0 %v62
    %124 = vmatprep.subr.mxu0 0.0
    %125 = vmatpush2.msra.mxu0 %v61
    %126 = vmatprep.subr.mxu0 0.0
    %127 = vmatpush2.msra.mxu0 %v60
    %128 = vmatprep.subr.mxu0 0.0
    %129 = vmatpush2.msra.mxu0 %v59
    %130 = vmatprep.subr.mxu0 0.0
    %131 = vmatpush2.msra.mxu0 %v58
    %132 = vmatprep.subr.mxu0 0.0
    %133 = vmatpush2.msra.mxu0 %v57
    %134 = vmatprep.subr.mxu0 0.0
    %135 = vmatpush2.msra.mxu0 %v56
    %136 = vmatprep.mubr.f32.mxu0 %v39
    %137 = vmatmul.mubr.f32.gmra.mxu0 %v38
    %v138 = vpop.f32.mrf.mxu0
    %v139 = vadd.f32 0.0, %v138
    %v140 = vpop.f32.mrf.mxu0
    %141 = vdwg.mxu0
    %142 = vst [vmem:[#allocation7] sm:$0xff] %v139
    // Predicated region
    $region18: #{tpu_custom_call.1} parent=1 // pred_check
      _
    $region19: #{tpu_custom_call.1} parent=1 // pred_check_branch
      %144 = sbr.rel (0) target = $region21
    $region20: #{tpu_custom_call.1} parent=1 // pred_region
      %s146 = ssub.s32 128, 128
      %147 = vsyncadd [#allocation4], %s146
      %s149 = sshll.u32 [#allocation7], 4
      %s150 = int_to_ptr.vmem [resolvable:$true] %s149
      %152 = dma.vmem_to_hbm [thread:$0]  %s150, 128, %s2, [#allocation4]
    $region21: #{tpu_custom_call.1} parent=1 // pred_fallthru
      _
    // Predicated region
    $region22: #{tpu_custom_call.1} parent=1 // pred_check
      _
    $region23: #{tpu_custom_call.1} parent=1 // pred_check_branch
      %154 = sbr.rel (0) target = $region25
    $region24: #{tpu_custom_call.1} parent=1 // pred_region
      %155 = dma.done [#allocation4], 128
    $region25: #{tpu_custom_call.1} parent=1 // pred_fallthru
      _
    %156 = vsyncpa [#allocation3], 1
    %157 = vsyncpa [#allocation6], 1
    %158 = vsyncpa [#allocation4], 1

</llo_original>
